<compile_context>
chip_gen: v6e
topology: v6e:2x2x1
jax: 0.10.0
libtpu: 0.0.40
codegen_flags: <defaults>
</compile_context>

<pallas_src>
import jax
import jax.numpy as jnp
from jax.experimental import pallas as pl
from jax.experimental.pallas import tpu as pltpu


# ----------------------------------------------------------------------------
# Path 1: direct HBM -> HBM DMA identity copy (no VMEM round trip, no reshape)
# ----------------------------------------------------------------------------
def encoder_stage_dma(x, *, target_block_bytes=4 * 1024 * 1024):
    """Identity staging via blocked HBM->HBM DMA, 2 copies kept in flight."""
    if x.ndim == 0 or x.size == 0:
        return x  # degenerate inputs: nothing to stage, no launch

    rows = x.shape[0]
    row_bytes = (x.size // rows) * x.dtype.itemsize
    tr = max(1, min(rows, target_block_bytes // max(1, row_bytes)))
    full_blocks = rows // tr          # static Python ints
    tail = rows - full_blocks * tr    # ragged tail handled with one extra DMA

    def kernel(x_hbm, o_hbm):
        def body(sems):
            def copy(r0, nr, slot):
                return pltpu.make_async_copy(
                    x_hbm.at[pl.ds(r0, nr)],
                    o_hbm.at[pl.ds(r0, nr)],
                    sems.at[slot])

            # Prime up to two DMAs, then wait(b) / start(b+2) each step so two
            # copies are always in flight (DMA-engine bound, zero VMEM use).
            copy(0, tr, 0).start()
            if full_blocks > 1:
                copy(tr, tr, 1).start()

            @pl.loop(0, full_blocks)
            def _(b):
                slot = b & 1
                copy(b * tr, tr, slot).wait()

                @pl.when(b + 2 < full_blocks)
                def _():
                    copy((b + 2) * tr, tr, slot).start()

            if tail > 0:
                c = copy(full_blocks * tr, tail, 0)
                c.start()
                c.wait()

        pl.run_scoped(body, pltpu.SemaphoreType.DMA((2,)))

    nbytes = x.size * x.dtype.itemsize
    return pl.pallas_call(
        kernel,
        out_shape=jax.ShapeDtypeStruct(x.shape, x.dtype),
        in_specs=[pl.BlockSpec(memory_space=pl.ANY)],
        out_specs=pl.BlockSpec(memory_space=pl.ANY),
        cost_estimate=pl.CostEstimate(
            flops=0, transcendentals=0, bytes_accessed=2 * nbytes),
    )(x)


# ----------------------------------------------------------------------------
# Path 2: tiled, pipelined VMEM staging (building block for real subclasses)
# ----------------------------------------------------------------------------
def _vmem_copy_kernel(x_ref, o_ref):
    # Identity "forward": the abstract Encoder defines no transformation.
    o_ref[...] = x_ref[...]


def _sublane_pack(dtype):
    """Sublane packing factor: 8 for 32-bit, 16 for 16-bit, 32 for 8-bit."""
    return {4: 8, 2: 16, 1: 32}.get(jnp.dtype(dtype).itemsize, 8)


def _row_tile(rows, cols, dtype, target_bytes):
    """Sublane-aligned row tile, ~target_bytes per input block, >=2 grid steps
    when the array is tall enough (so v7x's two TensorCores both get work)."""
    sub = _sublane_pack(dtype)
    itemsize = jnp.dtype(dtype).itemsize
    t = max(sub, (target_bytes // max(1, cols * itemsize)) // sub * sub)
    if t >= rows:
        half = (rows // 2) // sub * sub
        t = half if half >= sub else rows  # block == full dim is legal
    return min(t, rows)


def encoder_stage_vmem(x, *, target_block_bytes=2 * 1024 * 1024):
    """Identity staging through VMEM (BlockSpec auto-pipelined, lane-dense)."""
    if x.ndim == 0 or x.size == 0:
        return x

    orig_shape = x.shape
    n = x.size
    pad_to = None

    if x.ndim >= 2 and orig_shape[-1] % 128 == 0:
        # Already lane-dense: collapse leading dims only (no lane relayout).
        cols = orig_shape[-1]
        rows = n // cols
        x2 = x.reshape(rows, cols)
    else:
        flat = x.reshape(-1)
        cols = None
        for c in (1024, 512, 256, 128):
            if n % c == 0:
                cols = c
                break
        if cols is None:
            # Pad to the next multiple of 128 so every store is full-lane
            # (unmasked vst); slice the padding off after the kernel.
            cols = 128
            pad_to = pl.cdiv(n, 128) * 128
            flat = jnp.pad(flat, (0, pad_to - n))
        rows = flat.shape[0] // cols
        x2 = flat.reshape(rows, cols)

    tr = _row_tile(rows, cols, x2.dtype, target_block_bytes)
    spec = pl.BlockSpec((tr, cols), lambda i: (i, 0))
    nbytes = n * x.dtype.itemsize

    out2 = pl.pallas_call(
        _vmem_copy_kernel,
        out_shape=jax.ShapeDtypeStruct((rows, cols), x2.dtype),
        grid=(pl.cdiv(rows, tr),),
        in_specs=[spec],
        out_specs=spec,
        compiler_params=pltpu.CompilerParams(
            dimension_semantics=("parallel",),
            # Explicit scoped-VMEM budget: 2 MiB blocks * (in+out) * double
            # buffering ~= 8 MiB; 32 MiB is safe on v5e/v6e/v7x alike.
            vmem_limit_bytes=32 * 1024 * 1024),
        cost_estimate=pl.CostEstimate(
            flops=0, transcendentals=0, bytes_accessed=2 * nbytes),
    )(x2)

    if pad_to is not None:
        out2 = out2.reshape(-1)[:n]
    return out2.reshape(orig_shape)


# ----------------------------------------------------------------------------
# Module
# ----------------------------------------------------------------------------
class Encoder:
    """编码器-解码器架构的基本编码器接口 (JAX/Pallas version)."""

    def __init__(self, stage_mode=None, **kwargs):
        # The torch module registers no parameters; nothing to initialize.
        # stage_mode: None  -> zero-cost pass-through (abstract base behavior),
        #             "dma" -> HBM->HBM DMA identity staging,
        #             "vmem"-> tiled VMEM staging (subclass building block).
        self._stage_mode = stage_mode

    def forward(self, X, *args):
        # Abstract in torch (raises NotImplementedError).  The zero-cost
        # equivalent is returning X untouched — no HBM traffic, no launch.
        if self._stage_mode == "dma":
            return encoder_stage_dma(X)
        if self._stage_mode == "vmem":
            return encoder_stage_vmem(X)
        return X

    __call__ = forward


if __name__ == "__main__":
    key = jax.random.PRNGKey(0)
    batch, seq_len, num_hiddens = 2, 8, 32
    X = jax.random.normal(key, (batch, seq_len, num_hiddens), dtype=jnp.float32)

    # Default (abstract) path: no kernel launch at all.
    enc = Encoder()
    assert enc(X) is X

    # HBM->HBM DMA staging path (identity, no VMEM round trip).
    out_dma = jax.block_until_ready(Encoder(stage_mode="dma")(X))
    assert out_dma.shape == X.shape and out_dma.dtype == X.dtype
    assert bool(jnp.array_equal(out_dma, X)), "dma identity mismatch"

    # Exercise the multi-block, double-buffered DMA loop (full blocks + tail)
    # by shrinking the per-block budget on a taller input.
    Y = jax.random.normal(jax.random.PRNGKey(1), (37, 8, 128), jnp.float32)
    out_y = jax.block_until_ready(encoder_stage_dma(Y, target_block_bytes=16 * 1024))
    assert bool(jnp.array_equal(out_y, Y)), "blocked dma mismatch"

    # VMEM-staged path: lane-dense reshape branch (2*8*32 -> (1, 512)).
    out_vmem = jax.block_until_ready(Encoder(stage_mode="vmem")(X))
    assert bool(jnp.array_equal(out_vmem, X)), "vmem identity mismatch"

    # VMEM-staged path: pad-to-128 fallback (105 elements, not 128-divisible).
    Z = jax.random.normal(jax.random.PRNGKey(2), (3, 5, 7), jnp.float32)
    out_z = jax.block_until_ready(encoder_stage_vmem(Z))
    assert bool(jnp.array_equal(out_z, Z)), "padded vmem identity mismatch"

    # VMEM-staged path: already-lane-dense bf16 input (collapse leading dims
    # only, 16-sublane-aligned tile, multi-step grid).
    W = jax.random.normal(jax.random.PRNGKey(3), (4, 16, 256)).astype(jnp.bfloat16)
    out_w = jax.block_until_ready(encoder_stage_vmem(W, target_block_bytes=64 * 1024))
    assert bool(jnp.array_equal(out_w, W)), "bf16 vmem identity mismatch"

    print("KERNEL_OK")
</pallas_src>

<mosaic_0001>
module attributes {stable_mosaic.version = 11 : i64} {
  func.func @kernel(%arg0: memref<2x8x32xf32, #tpu.memory_space<any>>, %arg1: memref<2x8x32xf32, #tpu.memory_space<any>>) attributes {dimension_semantics = [], scalar_prefetch = 0 : i64, scratch_operands = 0 : i64, tpu.core_type = #tpu.core_type<tc>} {
    "tpu.region"() ({
      %0 = tpu.sem_alloc : memref<2x!tpu.dma_semaphore, #tpu.memory_space<semaphore_mem>>
      %c0_i32 = arith.constant 0 : i32
      %c0_i32_0 = arith.constant 0 : i32
      %c0_i32_1 = arith.constant 0 : i32
      %c0_i32_2 = arith.constant 0 : i32
      %1 = tpu.memref_slice %arg0[%c0_i32_0, %c0_i32_1, %c0_i32_2] : memref<2x8x32xf32, #tpu.memory_space<any>> -> memref<2x8x32xf32, #tpu.memory_space<any>>
      %c0_i32_3 = arith.constant 0 : i32
      %c0_i32_4 = arith.constant 0 : i32
      %c0_i32_5 = arith.constant 0 : i32
      %2 = tpu.memref_slice %arg1[%c0_i32_3, %c0_i32_4, %c0_i32_5] : memref<2x8x32xf32, #tpu.memory_space<any>> -> memref<2x8x32xf32, #tpu.memory_space<any>>
      %3 = tpu.memref_slice %0[%c0_i32] : memref<2x!tpu.dma_semaphore, #tpu.memory_space<semaphore_mem>> -> memref<1x!tpu.dma_semaphore, #tpu.memory_space<semaphore_mem>>
      %4 = tpu.memref_squeeze %3 : memref<1x!tpu.dma_semaphore, #tpu.memory_space<semaphore_mem>> -> memref<!tpu.dma_semaphore, #tpu.memory_space<semaphore_mem>>
      tpu.enqueue_dma source(%1 : memref<2x8x32xf32, #tpu.memory_space<any>>) target(%2 : memref<2x8x32xf32, #tpu.memory_space<any>>) target_semaphore(%4 : memref<!tpu.dma_semaphore, #tpu.memory_space<semaphore_mem>>)
      %c0_i32_6 = arith.constant 0 : i32
      %c1_i32 = arith.constant 1 : i32
      %5 = arith.muli %c0_i32_6, %c1_i32 : i32
      %c0_i32_7 = arith.constant 0 : i32
      %6 = arith.addi %c0_i32_7, %5 : i32
      %c1_i32_8 = arith.constant 1 : i32
      %7 = arith.andi %6, %c1_i32_8 : i32
      %c2_i32 = arith.constant 2 : i32
      %8 = arith.muli %6, %c2_i32 : i32
      %c0_i32_9 = arith.constant 0 : i32
      %c0_i32_10 = arith.constant 0 : i32
      %9 = tpu.memref_slice %arg0[%8, %c0_i32_9, %c0_i32_10] : memref<2x8x32xf32, #tpu.memory_space<any>> -> memref<2x8x32xf32, #tpu.memory_space<any>>
      %c0_i32_11 = arith.constant 0 : i32
      %c0_i32_12 = arith.constant 0 : i32
      %10 = tpu.memref_slice %arg1[%8, %c0_i32_11, %c0_i32_12] : memref<2x8x32xf32, #tpu.memory_space<any>> -> memref<2x8x32xf32, #tpu.memory_space<any>>
      %11 = tpu.memref_slice %0[%7] : memref<2x!tpu.dma_semaphore, #tpu.memory_space<semaphore_mem>> -> memref<1x!tpu.dma_semaphore, #tpu.memory_space<semaphore_mem>>
      %12 = tpu.memref_squeeze %11 : memref<1x!tpu.dma_semaphore, #tpu.memory_space<semaphore_mem>> -> memref<!tpu.dma_semaphore, #tpu.memory_space<semaphore_mem>>
      tpu.wait_dma2 semaphore(%12 : memref<!tpu.dma_semaphore, #tpu.memory_space<semaphore_mem>>) src(%9 : memref<2x8x32xf32, #tpu.memory_space<any>>) dst(%10 : memref<2x8x32xf32, #tpu.memory_space<any>>)
      %c2_i32_13 = arith.constant 2 : i32
      %13 = arith.addi %6, %c2_i32_13 : i32
      %c1_i32_14 = arith.constant 1 : i32
      %14 = arith.cmpi slt, %13, %c1_i32_14 : i32
      %15 = arith.extui %14 : i1 to i32
      %c0_i32_15 = arith.constant 0 : i32
      %16 = arith.cmpi ne, %15, %c0_i32_15 : i32
      scf.if %16 {
        %c2_i32_17 = arith.constant 2 : i32
        %17 = arith.addi %6, %c2_i32_17 : i32
        %c2_i32_18 = arith.constant 2 : i32
        %18 = arith.muli %17, %c2_i32_18 : i32
        %c0_i32_19 = arith.constant 0 : i32
        %c0_i32_20 = arith.constant 0 : i32
        %19 = tpu.memref_slice %arg0[%18, %c0_i32_19, %c0_i32_20] : memref<2x8x32xf32, #tpu.memory_space<any>> -> memref<2x8x32xf32, #tpu.memory_space<any>>
        %c0_i32_21 = arith.constant 0 : i32
        %c0_i32_22 = arith.constant 0 : i32
        %20 = tpu.memref_slice %arg1[%18, %c0_i32_21, %c0_i32_22] : memref<2x8x32xf32, #tpu.memory_space<any>> -> memref<2x8x32xf32, #tpu.memory_space<any>>
        %21 = tpu.memref_slice %0[%7] : memref<2x!tpu.dma_semaphore, #tpu.memory_space<semaphore_mem>> -> memref<1x!tpu.dma_semaphore, #tpu.memory_space<semaphore_mem>>
        %22 = tpu.memref_squeeze %21 : memref<1x!tpu.dma_semaphore, #tpu.memory_space<semaphore_mem>> -> memref<!tpu.dma_semaphore, #tpu.memory_space<semaphore_mem>>
        tpu.enqueue_dma source(%19 : memref<2x8x32xf32, #tpu.memory_space<any>>) target(%20 : memref<2x8x32xf32, #tpu.memory_space<any>>) target_semaphore(%22 : memref<!tpu.dma_semaphore, #tpu.memory_space<semaphore_mem>>)
      } else {
      }
      %c1_i32_16 = arith.constant 1 : i32
      tpu.yield
    }) : () -> ()
    return
  }
}

</mosaic_0001>

<llo_original>
// kernel: tpu_custom_call.1
$region0: #{tpu_custom_call.1}
  #allocation0 [shape = 'u32[]', space=smem, size = 0x4, offset = 0x4, fixed_abs, tag = 'smem constant byte address 0x4 - core index']
  #allocation1 [shape = 'u32[144,128]{1,0:T(1,128)}', space=vmem, size = 0x12000, scoped, tag = 'internal scratch']
  #allocation3 [shape = 's32[]', space=sflag, size = 0x4, offset = 0, fixed_abs, tag = 'sflag constant byte address 0x0 - dummy sync flag']
  #allocation4 [shape = 'u32[0]{0}', space=smem, size = 0, offset = 0, fixed_abs, tag = 'smem constant byte address 0x0 - null']
  %s0 = inlined_call_operand.hbm [shape: f32[2,8,32], index: 0, kind: input, shape index: {}]
  %s1 = inlined_call_operand.hbm [shape: f32[2,8,32], index: 1, kind: output, shape index: {}]
  %s2 = sld [smem:[#allocation0]]
  $region3: #{tpu_custom_call.1} parent=0
    _
  %s4 = ssub.s32 1, %s2
  %s5 = scalar_select 0, %s4, %s2
  $region2: #{tpu_custom_call.1} parent=0
    #allocation2 [shape = 's32[2]{0}', space=sflag, size = 0x8, scoped, tag = 'scoped memory for tpu_custom_call.1']
    %s7 = sshll.u32 1, 14
    %s8 = sxor.u32 4294967295, %s7
    %12 = dma.general %s0, 256, %s1, [#allocation2], 131072, [#allocation4], 0, 0
    %s13 = smul.u32 2, 8
    %s14 = smul.u32 %s13, 1
    %s15 = sshll.u32 %s14, 4
    %16 = dma.done [#allocation2], %s15

</llo_original>
